<compile_context>
chip_gen: v5e
topology: v5e:2x2
jax: 0.10.0
libtpu: 0.0.40
codegen_flags: <defaults>
</compile_context>

<pallas_src>
import functools

import jax
import jax.numpy as jnp
from jax.experimental import pallas as pl
from jax.experimental.pallas import tpu as pltpu

_LANES = 128
_SUBLANES = 8
_MAX_BLOCK_ROWS = 1024          # 1024 rows * 128 lanes * 4 B = 512 KiB / fp32 input block


def _dice_partial_kernel(logits_ref, targets_ref, out_ref, *,
                         r, r_block, chunk_rows, n_chunks, per_split,
                         needs_mask):
    """Accumulate per-(sample, split) (intersection, prob-sum, target-sum).

    logits_ref / targets_ref: (1, r_block, 128) tiles of one sample.
    out_ref: (1, 1, 3, chunk_rows, 128) resident f32 accumulator.
    """
    s = pl.program_id(1)
    j = pl.program_id(2)

    @pl.when(j == 0)
    def _init():
        out_ref[...] = jnp.zeros_like(out_ref)

    # First global (128-lane) row covered by this block.
    row0 = (s * per_split + j) * r_block

    def make_chunk(masked):
        def chunk(g, carry):
            acc_i, acc_p, acc_t = carry
            off = g * chunk_rows
            if n_chunks > 1:
                off = pl.multiple_of(off, chunk_rows)
            # Cast in-kernel; all arithmetic stays f32 (v5e has no bf16 VPU/EUP).
            x = logits_ref[0, pl.ds(off, chunk_rows), :].astype(jnp.float32)
            t = targets_ref[0, pl.ds(off, chunk_rows), :].astype(jnp.float32)
            # sigmoid(x) = 0.5 * tanh(0.5 x) + 0.5  (one EUP push, no divide).
            p = 0.5 * jnp.tanh(0.5 * x) + 0.5
            if masked:
                rows = jax.lax.broadcasted_iota(
                    jnp.int32, (chunk_rows, _LANES), 0)
                valid = (row0 + off + rows) < r
                p = jnp.where(valid, p, 0.0)
                t = jnp.where(valid, t, 0.0)
            return acc_i + p * t, acc_p + p, acc_t + t
        return chunk

    def accumulate(masked):
        zero = jnp.zeros((chunk_rows, _LANES), jnp.float32)
        init = (zero, zero, zero)
        chunk = make_chunk(masked)
        if n_chunks > 1:
            acc_i, acc_p, acc_t = jax.lax.fori_loop(
                0, n_chunks, chunk, init, unroll=min(8, n_chunks))
        else:
            acc_i, acc_p, acc_t = chunk(0, init)
        out_ref[0, 0, 0] += acc_i   # intersection partial
        out_ref[0, 0, 1] += acc_p   # probas-sum partial
        out_ref[0, 0, 2] += acc_t   # targets-sum partial

    if needs_mask:
        # Only the block straddling the true row count needs masking.
        ragged = row0 + r_block > r

        @pl.when(ragged)
        def _masked():
            accumulate(True)

        @pl.when(jnp.logical_not(ragged))
        def _unmasked():
            accumulate(False)
    else:
        accumulate(False)


def dice_loss(logits, targets, smooth=1e-6):
    """Pallas TPU implementation of DiceLoss.forward.

    Args:
      logits:  (N, 1, H, W) model logits (any float dtype; bf16 supported).
      targets: (N, 1, H, W) ground-truth labels (any dtype castable to float).
    Returns:
      scalar float32 dice loss.
    """
    n = logits.shape[0]
    d = 1
    for dim in logits.shape[1:]:
        d *= dim

    logits2d = logits.reshape(n, d)
    targets2d = targets.reshape(n, d)

    r = d // _LANES          # full 128-lane rows per sample
    d_main = r * _LANES      # 128-aligned prefix streamed through the kernel

    inter = jnp.zeros((n,), jnp.float32)
    p_sum = jnp.zeros((n,), jnp.float32)
    t_sum = jnp.zeros((n,), jnp.float32)

    if r > 0:
        if d_main == d:
            main_l = logits2d.reshape(n, r, _LANES)   # free row-major view
            main_t = targets2d.reshape(n, r, _LANES)
        else:
            main_l = logits2d[:, :d_main].reshape(n, r, _LANES)
            main_t = targets2d[:, :d_main].reshape(n, r, _LANES)

        if r <= _SUBLANES:
            r_block = r                     # full-extent block (legal)
            chunk_rows = r
            n_chunks = 1
        else:
            r_block = min(_MAX_BLOCK_ROWS, (r // _SUBLANES) * _SUBLANES)
            chunk_rows = _SUBLANES
            n_chunks = r_block // _SUBLANES

        total_blocks = pl.cdiv(r, r_block)
        # Optional row split -> second "parallel" axis so both TensorCores get
        # work on v7x even when N is 1 / odd. Only when it tiles evenly.
        n_split = 2 if (total_blocks >= 2 and total_blocks % 2 == 0) else 1
        per_split = total_blocks // n_split
        needs_mask = (r % r_block) != 0

        kernel = functools.partial(
            _dice_partial_kernel, r=r, r_block=r_block, chunk_rows=chunk_rows,
            n_chunks=n_chunks, per_split=per_split, needs_mask=needs_mask)

        partials = pl.pallas_call(
            kernel,
            out_shape=jax.ShapeDtypeStruct(
                (n, n_split, 3, chunk_rows, _LANES), jnp.float32),
            grid_spec=pltpu.PrefetchScalarGridSpec(
                num_scalar_prefetch=0,
                grid=(n, n_split, per_split),
                in_specs=[
                    pl.BlockSpec((1, r_block, _LANES),
                                 lambda i, s, j: (i, s * per_split + j, 0)),
                    pl.BlockSpec((1, r_block, _LANES),
                                 lambda i, s, j: (i, s * per_split + j, 0)),
                ],
                out_specs=pl.BlockSpec((1, 1, 3, chunk_rows, _LANES),
                                       lambda i, s, j: (i, s, 0, 0, 0)),
            ),
            compiler_params=pltpu.CompilerParams(
                dimension_semantics=("parallel", "parallel", "arbitrary")),
        )(main_l, main_t)

        # Tiny epilogue in plain JAX: reduce lane-dense partials.
        sums = jnp.sum(partials, axis=(1, 3, 4))          # (n, 3)
        inter = inter + sums[:, 0]
        p_sum = p_sum + sums[:, 1]
        t_sum = t_sum + sums[:, 2]

    if d_main != d:
        # <=127 element per-sample tail: negligible, handled in plain JAX
        # (avoids a full extra HBM pad pass over both arrays).
        tail_l = logits2d[:, d_main:].astype(jnp.float32)
        tail_t = targets2d[:, d_main:].astype(jnp.float32)
        tail_p = jax.nn.sigmoid(tail_l)
        inter = inter + jnp.sum(tail_p * tail_t, axis=1)
        p_sum = p_sum + jnp.sum(tail_p, axis=1)
        t_sum = t_sum + jnp.sum(tail_t, axis=1)

    dice_coeff = (2.0 * inter + smooth) / (p_sum + t_sum + smooth)
    return (1.0 - jnp.mean(dice_coeff)).astype(jnp.float32)


def dice_loss_ref(logits, targets, smooth=1e-6):
    """Pure-JAX reference matching the PyTorch module semantics."""
    n = logits.shape[0]
    probas = jax.nn.sigmoid(logits.astype(jnp.float32)).reshape(n, -1)
    targets = targets.astype(jnp.float32).reshape(n, -1)
    intersection = jnp.sum(probas * targets, axis=1)
    dice_coeff = (2.0 * intersection + smooth) / (
        jnp.sum(probas, axis=1) + jnp.sum(targets, axis=1) + smooth)
    return 1.0 - jnp.mean(dice_coeff)


def _check(shape, key, logits_dtype=jnp.float32, tol=1e-5):
    k1, k2 = jax.random.split(key)
    logits = jax.random.normal(k1, shape, dtype=jnp.float32).astype(logits_dtype)
    targets = (jax.random.uniform(k2, shape) > 0.5).astype(jnp.float32)
    loss = jax.block_until_ready(dice_loss(logits, targets))
    ref = dice_loss_ref(logits, targets)
    assert jnp.allclose(loss, ref, atol=tol, rtol=tol), (shape, loss, ref)


if __name__ == "__main__":
    key = jax.random.PRNGKey(0)
    ks = jax.random.split(key, 5)

    # Primary shape implied by the module: (N, 1, H, W) with N=2, H=W=16.
    _check((2, 1, 16, 16), ks[0])
    # Larger spatial dim: exercises the chunked fori_loop accumulation path.
    _check((2, 1, 64, 64), ks[1])
    # Non-lane-aligned spatial dim: exercises the plain-JAX tail path.
    _check((2, 1, 15, 15), ks[2])
    # Ragged last row block + row-split parallel axis + 1-element tail.
    _check((1, 1, 129, 129), ks[3])
    # bf16 logits streamed from HBM, cast to f32 in-kernel.
    _check((2, 1, 64, 64), ks[4], logits_dtype=jnp.bfloat16, tol=1e-4)

    print("KERNEL_OK")
</pallas_src>

<mosaic_0001>
module attributes {stable_mosaic.version = 11 : i64} {
  func.func @_dice_partial_kernel(%arg0: i32, %arg1: i32, %arg2: i32, %arg3: memref<1x2x128xf32, #tpu.memory_space<vmem>>, %arg4: memref<1x2x128xf32, #tpu.memory_space<vmem>>, %arg5: memref<1x1x3x2x128xf32, #tpu.memory_space<vmem>>) attributes {dimension_semantics = [#tpu.dimension_semantics<parallel>, #tpu.dimension_semantics<parallel>, #tpu.dimension_semantics<arbitrary>], iteration_bounds = array<i64: 2, 1, 1>, scalar_prefetch = 0 : i64, scratch_operands = 0 : i64, tpu.core_type = #tpu.core_type<tc>, window_params = [{transform_indices = @transform_0, window_bounds = array<i64: 1, 2, 128>}, {transform_indices = @transform_1, window_bounds = array<i64: 1, 2, 128>}, {transform_indices = @transform_2, window_bounds = array<i64: 1, 1, 3, 2, 128>}]} {
    %c0_i32 = arith.constant 0 : i32
    %0 = arith.cmpi eq, %arg2, %c0_i32 : i32
    %1 = arith.extui %0 : i1 to i32
    %c0_i32_0 = arith.constant 0 : i32
    %2 = arith.cmpi ne, %1, %c0_i32_0 : i32
    scf.if %2 {
      %cst_37 = arith.constant 0.000000e+00 : f32
      %37 = vector.broadcast %cst_37 : f32 to vector<1x1x3x2x128xf32>
      %c0_38 = arith.constant 0 : index
      %c0_39 = arith.constant 0 : index
      %c0_40 = arith.constant 0 : index
      %c0_41 = arith.constant 0 : index
      %c0_42 = arith.constant 0 : index
      %38 = vector.load %arg5[%c0_38, %c0_39, %c0_40, %c0_41, %c0_42] : memref<1x1x3x2x128xf32, #tpu.memory_space<vmem>>, vector<1x1x3x2x128xf32>
      tpu.vector_store %arg5[%c0_38, %c0_39, %c0_40, %c0_41, %c0_42], %37 {strides = array<i32>} : memref<1x1x3x2x128xf32, #tpu.memory_space<vmem>>, vector<1x1x3x2x128xf32>,
    } else {
    }
    %cst = arith.constant 0.000000e+00 : f32
    %3 = vector.broadcast %cst : f32 to vector<2x128xf32>
    %c0 = arith.constant 0 : index
    %c0_1 = arith.constant 0 : index
    %c0_2 = arith.constant 0 : index
    %4 = vector.load %arg3[%c0, %c0_1, %c0_2] : memref<1x2x128xf32, #tpu.memory_space<vmem>>, vector<1x2x128xf32>
    %5 = vector.shape_cast %4 : vector<1x2x128xf32> to vector<2x128xf32>
    %c0_3 = arith.constant 0 : index
    %c0_4 = arith.constant 0 : index
    %c0_5 = arith.constant 0 : index
    %6 = vector.load %arg4[%c0_3, %c0_4, %c0_5] : memref<1x2x128xf32, #tpu.memory_space<vmem>>, vector<1x2x128xf32>
    %7 = vector.shape_cast %6 : vector<1x2x128xf32> to vector<2x128xf32>
    %cst_6 = arith.constant 5.000000e-01 : f32
    %8 = vector.broadcast %cst_6 : f32 to vector<2x128xf32>
    %9 = arith.mulf %8, %5 : vector<2x128xf32>
    %10 = math.tanh %9 : vector<2x128xf32>
    %cst_7 = arith.constant 5.000000e-01 : f32
    %11 = vector.broadcast %cst_7 : f32 to vector<2x128xf32>
    %12 = arith.mulf %11, %10 : vector<2x128xf32>
    %cst_8 = arith.constant 5.000000e-01 : f32
    %13 = vector.broadcast %cst_8 : f32 to vector<2x128xf32>
    %14 = arith.addf %12, %13 : vector<2x128xf32>
    %15 = arith.mulf %14, %7 : vector<2x128xf32>
    %16 = arith.addf %3, %15 : vector<2x128xf32>
    %17 = arith.addf %3, %14 : vector<2x128xf32>
    %18 = arith.addf %3, %7 : vector<2x128xf32>
    %c0_9 = arith.constant 0 : index
    %c0_10 = arith.constant 0 : index
    %c0_11 = arith.constant 0 : index
    %c0_12 = arith.constant 0 : index
    %c0_13 = arith.constant 0 : index
    %19 = vector.load %arg5[%c0_9, %c0_10, %c0_11, %c0_12, %c0_13] : memref<1x1x3x2x128xf32, #tpu.memory_space<vmem>>, vector<1x1x1x2x128xf32>
    %20 = vector.shape_cast %19 : vector<1x1x1x2x128xf32> to vector<2x128xf32>
    %21 = arith.addf %20, %16 : vector<2x128xf32>
    %c0_14 = arith.constant 0 : index
    %c0_15 = arith.constant 0 : index
    %c0_16 = arith.constant 0 : index
    %c0_17 = arith.constant 0 : index
    %c0_18 = arith.constant 0 : index
    %22 = vector.load %arg5[%c0_14, %c0_15, %c0_16, %c0_17, %c0_18] : memref<1x1x3x2x128xf32, #tpu.memory_space<vmem>>, vector<1x1x1x2x128xf32>
    %23 = vector.shape_cast %22 : vector<1x1x1x2x128xf32> to vector<2x128xf32>
    %24 = vector.shape_cast %21 : vector<2x128xf32> to vector<1x1x1x2x128xf32>
    tpu.vector_store %arg5[%c0_14, %c0_15, %c0_16, %c0_17, %c0_18], %24 {strides = array<i32>} : memref<1x1x3x2x128xf32, #tpu.memory_space<vmem>>, vector<1x1x1x2x128xf32>,
    %c0_19 = arith.constant 0 : index
    %c0_20 = arith.constant 0 : index
    %c1 = arith.constant 1 : index
    %c0_21 = arith.constant 0 : index
    %c0_22 = arith.constant 0 : index
    %25 = vector.load %arg5[%c0_19, %c0_20, %c1, %c0_21, %c0_22] : memref<1x1x3x2x128xf32, #tpu.memory_space<vmem>>, vector<1x1x1x2x128xf32>
    %26 = vector.shape_cast %25 : vector<1x1x1x2x128xf32> to vector<2x128xf32>
    %27 = arith.addf %26, %17 : vector<2x128xf32>
    %c0_23 = arith.constant 0 : index
    %c0_24 = arith.constant 0 : index
    %c1_25 = arith.constant 1 : index
    %c0_26 = arith.constant 0 : index
    %c0_27 = arith.constant 0 : index
    %28 = vector.load %arg5[%c0_23, %c0_24, %c1_25, %c0_26, %c0_27] : memref<1x1x3x2x128xf32, #tpu.memory_space<vmem>>, vector<1x1x1x2x128xf32>
    %29 = vector.shape_cast %28 : vector<1x1x1x2x128xf32> to vector<2x128xf32>
    %30 = vector.shape_cast %27 : vector<2x128xf32> to vector<1x1x1x2x128xf32>
    tpu.vector_store %arg5[%c0_23, %c0_24, %c1_25, %c0_26, %c0_27], %30 {strides = array<i32>} : memref<1x1x3x2x128xf32, #tpu.memory_space<vmem>>, vector<1x1x1x2x128xf32>,
    %c0_28 = arith.constant 0 : index
    %c0_29 = arith.constant 0 : index
    %c2 = arith.constant 2 : index
    %c0_30 = arith.constant 0 : index
    %c0_31 = arith.constant 0 : index
    %31 = vector.load %arg5[%c0_28, %c0_29, %c2, %c0_30, %c0_31] : memref<1x1x3x2x128xf32, #tpu.memory_space<vmem>>, vector<1x1x1x2x128xf32>
    %32 = vector.shape_cast %31 : vector<1x1x1x2x128xf32> to vector<2x128xf32>
    %33 = arith.addf %32, %18 : vector<2x128xf32>
    %c0_32 = arith.constant 0 : index
    %c0_33 = arith.constant 0 : index
    %c2_34 = arith.constant 2 : index
    %c0_35 = arith.constant 0 : index
    %c0_36 = arith.constant 0 : index
    %34 = vector.load %arg5[%c0_32, %c0_33, %c2_34, %c0_35, %c0_36] : memref<1x1x3x2x128xf32, #tpu.memory_space<vmem>>, vector<1x1x1x2x128xf32>
    %35 = vector.shape_cast %34 : vector<1x1x1x2x128xf32> to vector<2x128xf32>
    %36 = vector.shape_cast %33 : vector<2x128xf32> to vector<1x1x1x2x128xf32>
    tpu.vector_store %arg5[%c0_32, %c0_33, %c2_34, %c0_35, %c0_36], %36 {strides = array<i32>} : memref<1x1x3x2x128xf32, #tpu.memory_space<vmem>>, vector<1x1x1x2x128xf32>,
    return
  }
  func.func @transform_0(%arg0: i32, %arg1: i32, %arg2: i32) -> (i32, i32, i32) {
    %c1_i32 = arith.constant 1 : i32
    %0 = arith.muli %arg1, %c1_i32 : i32
    %1 = arith.addi %0, %arg2 : i32
    %c0_i32 = arith.constant 0 : i32
    %c0_i32_0 = arith.constant 0 : i32
    return %arg0, %1, %c0_i32 : i32, i32, i32
  }
  func.func @transform_1(%arg0: i32, %arg1: i32, %arg2: i32) -> (i32, i32, i32) {
    %c1_i32 = arith.constant 1 : i32
    %0 = arith.muli %arg1, %c1_i32 : i32
    %1 = arith.addi %0, %arg2 : i32
    %c0_i32 = arith.constant 0 : i32
    %c0_i32_0 = arith.constant 0 : i32
    return %arg0, %1, %c0_i32 : i32, i32, i32
  }
  func.func @transform_2(%arg0: i32, %arg1: i32, %arg2: i32) -> (i32, i32, i32, i32, i32) {
    %c0_i32 = arith.constant 0 : i32
    %c0_i32_0 = arith.constant 0 : i32
    %c0_i32_1 = arith.constant 0 : i32
    %c0_i32_2 = arith.constant 0 : i32
    return %arg0, %arg1, %c0_i32, %c0_i32_0, %c0_i32_1 : i32, i32, i32, i32, i32
  }
}

</mosaic_0001>

<llo_original>
// kernel: tpu_custom_call.1
$region0: #{tpu_custom_call.1}
  #allocation0 [shape = 'u32[]', space=smem, size = 0x4, offset = 0x4, fixed_abs, tag = 'smem constant byte address 0x4 - core index']
  #allocation1 [shape = 'u32[72,128]{1,0:T(1,128)}', space=vmem, size = 0x9000, scoped, tag = 'internal scratch']
  %s0 = inlined_call_operand.hbm [shape: f32[2,2,128], index: 0, kind: input, shape index: {}]
  %s1 = inlined_call_operand.hbm [shape: f32[2,2,128], index: 1, kind: input, shape index: {}]
  %s2 = inlined_call_operand.hbm [shape: f32[2,1,3,2,128], index: 2, kind: output, shape index: {}]
  %s3 = sld [smem:[#allocation0]]
  $region53: #{tpu_custom_call.1} parent=0
    _
  %s5 = ssub.s32 1, %s3
  %s6 = scalar_select 0, %s5, %s3
  $region1: #{tpu_custom_call.1} parent=0
    #allocation2 [shape = 'u8[2048]{0}', space=vmem, size = 0x800, scoped, tag = 'input window, operand 0']
    #allocation3 [shape = 's32[2]{0}', space=sflag, size = 0x8, scoped, tag = 'scoped memory for tpu_custom_call.1']
    #allocation4 [shape = 's32[2]{0}', space=sflag, size = 0x8, scoped, tag = 'scoped memory for tpu_custom_call.1']
    #allocation5 [shape = 'u8[2048]{0}', space=vmem, size = 0x800, scoped, tag = 'input window, operand 1']
    #allocation6 [shape = 's32[2]{0}', space=sflag, size = 0x8, scoped, tag = 'scoped memory for tpu_custom_call.1']
    #allocation7 [shape = 'u8[6144]{0}', space=vmem, size = 0x1800, scoped, tag = 'output window, operand 0']
    %7 = vsyncpa [#allocation3], 0
    %s8 = scalar_lea.sflag [#allocation3], 1
    %9 = vsyncpa %s8, 0
    %10 = vsyncpa [#allocation6], 0
    %s11 = scalar_lea.sflag [#allocation6], 1
    %12 = vsyncpa %s11, 0
    %13 = vsyncpa [#allocation4], 0
    %s14 = scalar_lea.sflag [#allocation4], 1
    %15 = vsyncpa %s14, 0
    loop: start=0, step=1, limit=4
    $region2: #{tpu_custom_call.1} parent=1 // loop_pre_header
      _
    $region3: #{tpu_custom_call.1} parent=1 // loop_header
      %s17 = sphi 0, %s21
      %p18 = scmp.ge.s32.totalorder %s17, 4
      %s24 = sphi 0, %s43
      %s25 = sphi 0, %s39
      %s26 = sphi 0, %s35
      %s27 = sphi 0, %s24
      %s28 = sphi 0, %s25
      %s29 = sphi 0, %s26
      %s30 = sphi 0, %s27
      %s31 = sphi 0, %s28
      %s32 = sphi 0, %s29
      %s50 = sphi 0, %s52
      %s53 = sphi 0, %s50
      %s54 = sphi 0, %s53
      %s70 = sphi 0, %s54
      %s80 = sphi 0, %s82
      %s83 = sphi 0, %s80
      %s84 = sphi 0, %s83
      %s100 = sphi 0, %s84
      %s108 = sphi 0, %s110
      %s111 = sphi 0, %s108
      %s112 = sphi 0, %s111
      %s128 = sphi 0, %s112
    $region4: #{tpu_custom_call.1} parent=1 // loop_header_branch
      %20 = sbr.rel (%p18) target = $region8
    $region5: #{tpu_custom_call.1} parent=1 // loop_body
      %s22 = ssub.s32 %s17, 1
      %s23 = ssub.s32 %s17, 2
      %s33 = sadd.s32 1, %s26
      %p34 = scmp.ge.s32.totalorder %s33, 1
      %s35 = scalar_select %p34, 0, %s33
      %s36 = sadd.s32 1, %s25
      %s37 = scalar_select %p34, %s36, %s25
      %p38 = scmp.ge.s32.totalorder %s37, 1
      %s39 = scalar_select %p38, 0, %s37
      %s40 = sadd.s32 1, %s24
      %s41 = scalar_select %p38, %s40, %s24
      %p42 = scmp.ge.s32.totalorder %s41, 2
      %s43 = scalar_select %p42, 0, %s41
      %s44 = sadd.s32 %s25, %s26
      %s45 = sadd.s32 %s39, %s35
      %s46 = ssub.s32 %s24, %s43
      %s47 = ssub.s32 %s44, %s45
      %s48 = sor.u32 %s46, %s47
      %p49 = scmp.eq.s32.totalorder %s48, 0
      %s51 = sadd.s32 %s50, 1
      %s52 = scalar_select %p49, %s50, %s51
      %p55 = pneg %p49
      %p56 = scmp.eq.s32.totalorder %s17, 1
      %p57 = por %p55, %p56
      %p58 = scmp.ne.s32.totalorder %s50, %s53
      %p59 = scmp.eq.s32.totalorder %s17, 0
      %p60 = por %p58, %p59
      %p61 = scmp.ne.s32.totalorder %s50, %s53
      %p62 = scmp.eq.s32.totalorder %s22, 1
      %p63 = por %p61, %p62
      %p64 = scmp.ne.s32.totalorder %s53, %s54
      %p65 = scmp.eq.s32.totalorder %s22, 0
      %p66 = por %p64, %p65
      %p67 = scmp.ne.s32.totalorder %s53, %s54
      %p68 = scmp.eq.s32.totalorder %s23, 1
      %p69 = por %p67, %p68
      %p71 = scmp.ne.s32.totalorder %s54, %s70
      %p72 = scmp.eq.s32.totalorder %s23, 0
      %p73 = por %p71, %p72
      %s74 = sadd.s32 %s25, %s26
      %s75 = sadd.s32 %s39, %s35
      %s76 = ssub.s32 %s24, %s43
      %s77 = ssub.s32 %s74, %s75
      %s78 = sor.u32 %s76, %s77
      %p79 = scmp.eq.s32.totalorder %s78, 0
      %s81 = sadd.s32 %s80, 1
      %s82 = scalar_select %p79, %s80, %s81
      %p85 = pneg %p79
      %p86 = scmp.eq.s32.totalorder %s17, 1
      %p87 = por %p85, %p86
      %p88 = scmp.ne.s32.totalorder %s80, %s83
      %p89 = scmp.eq.s32.totalorder %s17, 0
      %p90 = por %p88, %p89
      %p91 = scmp.ne.s32.totalorder %s80, %s83
      %p92 = scmp.eq.s32.totalorder %s22, 1
      %p93 = por %p91, %p92
      %p94 = scmp.ne.s32.totalorder %s83, %s84
      %p95 = scmp.eq.s32.totalorder %s22, 0
      %p96 = por %p94, %p95
      %p97 = scmp.ne.s32.totalorder %s83, %s84
      %p98 = scmp.eq.s32.totalorder %s23, 1
      %p99 = por %p97, %p98
      %p101 = scmp.ne.s32.totalorder %s84, %s100
      %p102 = scmp.eq.s32.totalorder %s23, 0
      %p103 = por %p101, %p102
      %s104 = ssub.s32 %s24, %s43
      %s105 = ssub.s32 %s25, %s39
      %s106 = sor.u32 %s104, %s105
      %p107 = scmp.eq.s32.totalorder %s106, 0
      %s109 = sadd.s32 %s108, 1
      %s110 = scalar_select %p107, %s108, %s109
      %p113 = pneg %p107
      %p114 = scmp.eq.s32.totalorder %s17, 1
      %p115 = por %p113, %p114
      %p116 = scmp.ne.s32.totalorder %s108, %s111
      %p117 = scmp.eq.s32.totalorder %s17, 0
      %p118 = por %p116, %p117
      %p119 = scmp.ne.s32.totalorder %s108, %s111
      %p120 = scmp.eq.s32.totalorder %s22, 1
      %p121 = por %p119, %p120
      %p122 = scmp.ne.s32.totalorder %s111, %s112
      %p123 = scmp.eq.s32.totalorder %s22, 0
      %p124 = por %p122, %p123
      %p125 = scmp.ne.s32.totalorder %s111, %s112
      %p126 = scmp.eq.s32.totalorder %s23, 1
      %p127 = por %p125, %p126
      %p129 = scmp.ne.s32.totalorder %s112, %s128
      %p130 = scmp.eq.s32.totalorder %s23, 0
      %p131 = por %p129, %p130
      %p132 = scmp.le.s32.totalorder 1, %s17
      %p133 = scmp.lt.s32.totalorder %s17, 3
      %p134 = pnand %p132, %p133
      %p135 = pneg %p134
      // Predicated region
      $region9: #{tpu_custom_call.1} parent=5 // pred_check
        _
      $region10: #{tpu_custom_call.1} parent=5 // pred_check_branch
        %137 = sbr.rel (%p134) target = $region12
      $region11: #{tpu_custom_call.1} parent=5 // pred_region
        %s138 = ssub.s32 %s17, 1
      $region12: #{tpu_custom_call.1} parent=5 // pred_fallthru
        _
      %p139 = scmp.lt.s32.totalorder %s17, 2
      // Predicated region
      $region13: #{tpu_custom_call.1} parent=5 // pred_check
        %p140 = pneg %p139
      $region14: #{tpu_custom_call.1} parent=5 // pred_check_branch
        %142 = sbr.rel (%p140) target = $region16
      $region15: #{tpu_custom_call.1} parent=5 // pred_region
        // Predicated region
        $region17: #{tpu_custom_call.1} parent=15 // pred_check
          %p143 = pneg %p60
        $region18: #{tpu_custom_call.1} parent=15 // pred_check_branch
          %145 = sbr.rel (%p143) target = $region20
        $region19: #{tpu_custom_call.1} parent=15 // pred_region
          %s146 = sand.u32 %s50, 1
          %s147 = scalar_lea.sflag [#allocation3], %s146
          %s148 = sand.u32 %s50, 1
          %s149 = smul.addr %s148, 2
          %s150 = scalar_lea.vmem [#allocation2], %s149
          %s151 = sadd.s32 %s25, %s26
          %153 = vsyncadd %s147, 0
          %s154 = sadd.s32 %s151, %s24
          %s155 = smul.addr %s154, 2
          %s156 = scalar_lea.hbm %s0, %s155
          %s158 = sshll.u32 %s156, 4
          %s159 = int_to_ptr.hbm [resolvable:$true] %s158
          %s160 = sshll.u32 %s150, 4
          %s161 = int_to_ptr.vmem [resolvable:$true] %s160
          %163 = dma.hbm_to_vmem [thread:$0]  %s159, 32, %s161, %s147
        $region20: #{tpu_custom_call.1} parent=15 // pred_fallthru
          _
        // Predicated region
        $region21: #{tpu_custom_call.1} parent=15 // pred_check
          %p164 = pneg %p90
        $region22: #{tpu_custom_call.1} parent=15 // pred_check_branch
          %166 = sbr.rel (%p164) target = $region24
        $region23: #{tpu_custom_call.1} parent=15 // pred_region
          %s167 = sand.u32 %s80, 1
          %s168 = scalar_lea.sflag [#allocation6], %s167
          %s169 = sand.u32 %s80, 1
          %s170 = smul.addr %s169, 2
          %s171 = scalar_lea.vmem [#allocation5], %s170
          %s172 = sadd.s32 %s25, %s26
          %174 = vsyncadd %s168, 0
          %s175 = sadd.s32 %s172, %s24
          %s176 = smul.addr %s175, 2
          %s177 = scalar_lea.hbm %s1, %s176
          %s179 = sshll.u32 %s177, 4
          %s180 = int_to_ptr.hbm [resolvable:$true] %s179
          %s181 = sshll.u32 %s171, 4
          %s182 = int_to_ptr.vmem [resolvable:$true] %s181
          %184 = dma.hbm_to_vmem [thread:$0]  %s180, 32, %s182, %s168
        $region24: #{tpu_custom_call.1} parent=15 // pred_fallthru
          _
      $region16: #{tpu_custom_call.1} parent=5 // pred_fallthru
        _
      %p185 = scmp.le.s32.totalorder 1, %s17
      %p186 = scmp.lt.s32.totalorder %s17, 3
      %p187 = pnand %p185, %p186
      %p188 = pneg %p187
      // Predicated region
      $region25: #{tpu_custom_call.1} parent=5 // pred_check
        _
      $region26: #{tpu_custom_call.1} parent=5 // pred_check_branch
        %190 = sbr.rel (%p187) target = $region28
      $region27: #{tpu_custom_call.1} parent=5 // pred_region
        %s191 = ssub.s32 %s17, 1
        %s192 = sand.u32 %s53, 1
        %s193 = scalar_lea.sflag [#allocation3], %s192
        %s194 = sand.u32 %s53, 1
        %s195 = smul.addr %s194, 2
        %s196 = scalar_lea.vmem [#allocation2], %s195
        // Predicated region
        $region29: #{tpu_custom_call.1} parent=27 // pred_check
          %p197 = pneg %p66
        $region30: #{tpu_custom_call.1} parent=27 // pred_check_branch
          %199 = sbr.rel (%p197) target = $region32
        $region31: #{tpu_custom_call.1} parent=27 // pred_region
          %201 = dma.done %s193, 32
        $region32: #{tpu_custom_call.1} parent=27 // pred_fallthru
          _
        %s202 = sand.u32 %s83, 1
        %s203 = scalar_lea.sflag [#allocation6], %s202
        %s204 = sand.u32 %s83, 1
        %s205 = smul.addr %s204, 2
        %s206 = scalar_lea.vmem [#allocation5], %s205
        // Predicated region
        $region33: #{tpu_custom_call.1} parent=27 // pred_check
          %p207 = pneg %p96
        $region34: #{tpu_custom_call.1} parent=27 // pred_check_branch
          %209 = sbr.rel (%p207) target = $region36
        $region35: #{tpu_custom_call.1} parent=27 // pred_region
          %211 = dma.done %s203, 32
        $region36: #{tpu_custom_call.1} parent=27 // pred_fallthru
          _
        %s212 = sand.u32 %s53, 1
        %s213 = scalar_lea.sflag [#allocation3], %s212
        %s214 = sand.u32 %s53, 1
        %s215 = smul.addr %s214, 2
        %s216 = scalar_lea.vmem [#allocation2], %s215
        %p217 = pneg %p66
        %p218 = pneg %p63
        %s219 = sand.u32 %s83, 1
        %s220 = scalar_lea.sflag [#allocation6], %s219
        %s221 = sand.u32 %s83, 1
        %s222 = smul.addr %s221, 2
        %s223 = scalar_lea.vmem [#allocation5], %s222
        %p224 = pneg %p96
        %p225 = pneg %p93
        %p226 = pneg %p124
        %p227 = pneg %p121
        %s228 = sand.u32 %s111, 1
        %s229 = scalar_lea.sflag [#allocation4], %s228
        %s230 = sand.u32 %s111, 1
        %s231 = smul.addr %s230, 6
        %s232 = scalar_lea.vmem [#allocation7], %s231
        %s233 = sadd.s32 %s28, %s29
        %s234 = sadd.s32 %s28, %s29
        %p235 = scmp.eq.s32.totalorder %s29, 0
        // Predicated region
        $region37: #{tpu_custom_call.1} parent=27 // pred_check
          %p236 = pneg %p235
        $region38: #{tpu_custom_call.1} parent=27 // pred_check_branch
          %238 = sbr.rel (%p236) target = $region40
        $region39: #{tpu_custom_call.1} parent=27 // pred_region
          %239 = vst [vmem:[%s232] sm:$0x3] 0.0
          %240 = vst [vmem:[%s232 + $0x2] sm:$0x3] 0.0
          %241 = vst [vmem:[%s232 + $0x4] sm:$0x3] 0.0
        $region40: #{tpu_custom_call.1} parent=27 // pred_fallthru
          _
        %v242 = vld [vmem:[%s196] sm:$0x3]
        %v243 = vld [vmem:[%s206] sm:$0x3]
        %v244 = vmul.f32 %v242, 0.5
        %v245 = vtanh.pop %v244
        %v246 = vmul.f32 %v245, 0.5
        %v247 = vadd.f32 %v246, 0.5
        %v248 = vmul.f32 %v247, %v243
        %v249 = vadd.f32 %v248, 0.0
        %v250 = vadd.f32 %v247, 0.0
        %v251 = vadd.f32 %v243, 0.0
        %v252 = vld [vmem:[%s232] sm:$0x3]
        %v253 = vadd.f32 %v252, %v249
        %254 = vst [vmem:[%s232] sm:$0x3] %v253
        %s255 = scalar_lea.vmem %s232, 2 [#allocation7]
        %v256 = vld [vmem:[%s255] sm:$0x3]
        %v257 = vadd.f32 %v256, %v250
        %258 = vst [vmem:[%s255] sm:$0x3] %v257
        %s259 = scalar_lea.vmem %s232, 4 [#allocation7]
        %v260 = vld [vmem:[%s259] sm:$0x3]
        %v261 = vadd.f32 %v260, %v251
        %262 = vst [vmem:[%s259] sm:$0x3] %v261
        %s263 = sand.u32 %s111, 1
        %s264 = scalar_lea.sflag [#allocation4], %s263
        %s265 = sand.u32 %s111, 1
        %s266 = smul.addr %s265, 6
        %s267 = scalar_lea.vmem [#allocation7], %s266
        // Predicated region
        $region41: #{tpu_custom_call.1} parent=27 // pred_check
          %p268 = pneg %p121
        $region42: #{tpu_custom_call.1} parent=27 // pred_check_branch
          %270 = sbr.rel (%p268) target = $region44
        $region43: #{tpu_custom_call.1} parent=27 // pred_region
          %272 = vsyncadd %s264, 0
          %s273 = smul.addr %s28, 3
          %s274 = smul.addr %s27, 3
          %s275 = sadd.s32 %s273, %s274
          %s276 = smul.addr %s275, 2
          %s277 = scalar_lea.hbm %s2, %s276
          %s278 = sshll.u32 %s267, 4
          %s279 = int_to_ptr.vmem [resolvable:$true] %s278
          %s280 = sshll.u32 %s277, 4
          %s281 = int_to_ptr.hbm [resolvable:$true] %s280
          %286 = dma.vmem_to_hbm [thread:$0]  %s279, 96, %s281, %s264, 32, 32, 2
        $region44: #{tpu_custom_call.1} parent=27 // pred_fallthru
          _
      $region28: #{tpu_custom_call.1} parent=5 // pred_fallthru
        _
      %p287 = scmp.le.s32.totalorder 2, %s17
      // Predicated region
      $region45: #{tpu_custom_call.1} parent=5 // pred_check
        %p288 = pneg %p287
      $region46: #{tpu_custom_call.1} parent=5 // pred_check_branch
        %290 = sbr.rel (%p288) target = $region48
      $region47: #{tpu_custom_call.1} parent=5 // pred_region
        %s291 = ssub.s32 %s17, 2
        // Predicated region
        $region49: #{tpu_custom_call.1} parent=47 // pred_check
          %p292 = pneg %p127
        $region50: #{tpu_custom_call.1} parent=47 // pred_check_branch
          %294 = sbr.rel (%p292) target = $region52
        $region51: #{tpu_custom_call.1} parent=47 // pred_region
          %s295 = sand.u32 %s112, 1
          %s296 = scalar_lea.sflag [#allocation4], %s295
          %s297 = sand.u32 %s112, 1
          %s298 = smul.addr %s297, 6
          %s299 = scalar_lea.vmem [#allocation7], %s298
          %301 = dma.done %s296, 96
        $region52: #{tpu_custom_call.1} parent=47 // pred_fallthru
          _
      $region48: #{tpu_custom_call.1} parent=5 // pred_fallthru
        _
    $region6: #{tpu_custom_call.1} parent=1 // loop_footer
      %s21 = sadd.s32 1, %s17
    $region7: #{tpu_custom_call.1} parent=1 // loop_footer_branch
      %16 = sbr.rel target = $region3
    $region8: #{tpu_custom_call.1} parent=1 // loop_exit
      _
    %302 = vsyncpa [#allocation3], 1
    %s303 = scalar_lea.sflag [#allocation3], 1
    %304 = vsyncpa %s303, 1
    %305 = vsyncpa [#allocation6], 1
    %s306 = scalar_lea.sflag [#allocation6], 1
    %307 = vsyncpa %s306, 1
    %308 = vsyncpa [#allocation4], 1
    %s309 = scalar_lea.sflag [#allocation4], 1
    %310 = vsyncpa %s309, 1

</llo_original>
